<compile_context>
chip_gen: v5e
topology: v5e:2x2
jax: 0.10.0
libtpu: 0.0.40
codegen_flags: <defaults>
</compile_context>

<pallas_src>
import functools
import math

import jax
import jax.numpy as jnp
from jax import lax
from jax.experimental import pallas as pl
from jax.experimental.pallas import tpu as pltpu


def _beit_self_attn_kernel(h_ref, w_ref, b_ref, o_ref, *, num_heads):
    # h_ref: (1, S, D)  hidden states for this batch element
    # w_ref: (D, 3D)    packed, pre-transposed QKV weights (grid-invariant)
    # b_ref: (1, 3D)    packed QKV bias
    # o_ref: (1, S, D)  output context, already in (B, S, H*d) layout
    x = h_ref[0]                                   # (S, D)
    D = x.shape[-1]
    d = D // num_heads
    scale = 1.0 / math.sqrt(d)

    # Fused QKV projection: one (S,D)x(D,3D) matmul, f32 accumulation.
    qkv = jnp.dot(x, w_ref[...], preferred_element_type=jnp.float32)
    qkv = qkv + b_ref[...]                         # (S, 3D), f32

    q = qkv[:, 0 * D:1 * D]
    k = qkv[:, 1 * D:2 * D]
    v = qkv[:, 2 * D:3 * D]

    ctxs = []
    for h in range(num_heads):                     # static unroll (num_heads is small)
        lo, hi = h * d, (h + 1) * d
        qh = q[:, lo:hi].astype(x.dtype)           # (S, d)
        kh = k[:, lo:hi].astype(x.dtype)
        vh = v[:, lo:hi].astype(x.dtype)

        # scores = q @ k^T, contracting the last dims so no explicit transpose
        s = lax.dot_general(
            qh, kh,
            dimension_numbers=(((1,), (1,)), ((), ())),
            preferred_element_type=jnp.float32) * scale          # (S, S)

        # numerically stable softmax; reciprocal on the EUP (approx vrcp)
        m = jnp.max(s, axis=-1, keepdims=True)
        e = jnp.exp(s - m)
        p = e * pl.reciprocal(jnp.sum(e, axis=-1, keepdims=True), approx=True)

        # TODO(synk): dropout on attention probs is identity here (eval / p=0).

        ctxs.append(jnp.dot(p.astype(x.dtype), vh,
                            preferred_element_type=jnp.float32))  # (S, d)

    # Single lane-dense (S, D) store; columns [h*d:(h+1)*d] hold head h, which
    # is exactly context.permute(0,2,1,3).reshape(B, S, H*d).
    o_ref[0] = jnp.concatenate(ctxs, axis=-1).astype(o_ref.dtype)


def beit_self_attention(hidden_states, wq, wk, wv, bq, bk, bv, num_heads,
                        compute_dtype=None):
    """hidden_states: (B, S, D); w*: (D, D) in nn.Linear (out, in) layout; b*: (D,).

    Returns (B, S, D), matching BeitSelfAttention.forward's output layout.
    Set compute_dtype=jnp.bfloat16 on v6e/v7x for MXU throughput (f32 accum).
    """
    B, S, D = hidden_states.shape
    assert D % num_heads == 0, "embedding dim must be divisible by num_heads"

    if compute_dtype is not None:
        hidden_states = hidden_states.astype(compute_dtype)
        wq, wk, wv = (w.astype(compute_dtype) for w in (wq, wk, wv))
        bq, bk, bv = (b.astype(compute_dtype) for b in (bq, bk, bv))

    # Pack + pre-transpose once at trace time (free, plain XLA):
    #   nn.Linear computes y = x @ W^T;  packing gives x @ W_qkv with N = 3D.
    w_qkv = jnp.concatenate([wq, wk, wv], axis=0).T              # (D, 3D)
    b_qkv = jnp.concatenate([bq, bk, bv], axis=0).reshape(1, 3 * D)

    kernel = functools.partial(_beit_self_attn_kernel, num_heads=num_heads)

    out = pl.pallas_call(
        kernel,
        out_shape=jax.ShapeDtypeStruct((B, S, D), hidden_states.dtype),
        grid_spec=pltpu.PrefetchScalarGridSpec(
            num_scalar_prefetch=0,
            grid=(B,),
            in_specs=[
                pl.BlockSpec((1, S, D), lambda b: (b, 0, 0)),     # hidden per batch
                pl.BlockSpec((D, 3 * D), lambda b: (0, 0)),       # QKV weights (resident)
                pl.BlockSpec((1, 3 * D), lambda b: (0, 0)),       # QKV bias (resident)
            ],
            out_specs=pl.BlockSpec((1, S, D), lambda b: (b, 0, 0)),
        ),
        compiler_params=pltpu.CompilerParams(
            dimension_semantics=("parallel",)),
    )(hidden_states, w_qkv, b_qkv)

    return out


def _reference(hidden_states, wq, wk, wv, bq, bk, bv, num_heads):
    B, S, D = hidden_states.shape
    H = num_heads
    d = D // H

    def lin(x, w, b):
        return jnp.einsum('bsd,od->bso', x, w) + b

    def split(x):
        return x.reshape(B, S, H, d).transpose(0, 2, 1, 3)  # (B, H, S, d)

    q = split(lin(hidden_states, wq, bq))
    k = split(lin(hidden_states, wk, bk))
    v = split(lin(hidden_states, wv, bv))
    scores = jnp.einsum('bhqd,bhkd->bhqk', q, k) / math.sqrt(d)
    probs = jax.nn.softmax(scores, axis=-1)
    ctx = jnp.einsum('bhqk,bhkd->bhqd', probs, v)
    return ctx.transpose(0, 2, 1, 3).reshape(B, S, D)


if __name__ == "__main__":
    # Small config consistent with the module: D = H * d
    B, S, D, H = 2, 8, 32, 4

    key = jax.random.PRNGKey(0)
    keys = jax.random.split(key, 7)
    hidden = jax.random.normal(keys[0], (B, S, D), dtype=jnp.float32)
    wq = jax.random.normal(keys[1], (D, D), dtype=jnp.float32) * 0.1
    wk = jax.random.normal(keys[2], (D, D), dtype=jnp.float32) * 0.1
    wv = jax.random.normal(keys[3], (D, D), dtype=jnp.float32) * 0.1
    bq = jax.random.normal(keys[4], (D,), dtype=jnp.float32) * 0.1
    bk = jax.random.normal(keys[5], (D,), dtype=jnp.float32) * 0.1
    bv = jax.random.normal(keys[6], (D,), dtype=jnp.float32) * 0.1

    out = beit_self_attention(hidden, wq, wk, wv, bq, bk, bv, num_heads=H)
    out = jax.block_until_ready(out)

    ref = _reference(hidden, wq, wk, wv, bq, bk, bv, num_heads=H)
    assert out.shape == (B, S, D)
    # Tolerance relaxed slightly vs. 1e-4: softmax uses the EUP approximate
    # reciprocal (pl.reciprocal(approx=True)).
    assert jnp.allclose(out, ref, atol=2e-3, rtol=2e-3), "mismatch vs reference"

    print("KERNEL_OK")
</pallas_src>

<mosaic_0001>
module attributes {stable_mosaic.version = 11 : i64} {
  func.func @_beit_self_attn_kernel(%arg0: i32, %arg1: memref<1x8x32xf32, #tpu.memory_space<vmem>>, %arg2: memref<32x96xf32, #tpu.memory_space<vmem>>, %arg3: memref<1x96xf32, #tpu.memory_space<vmem>>, %arg4: memref<1x8x32xf32, #tpu.memory_space<vmem>>) attributes {dimension_semantics = [#tpu.dimension_semantics<parallel>], iteration_bounds = array<i64: 2>, scalar_prefetch = 0 : i64, scratch_operands = 0 : i64, tpu.core_type = #tpu.core_type<tc>, window_params = [{transform_indices = @transform_0, window_bounds = array<i64: 1, 8, 32>}, {pipeline_mode = #tpu.pipeline_mode<synchronous>, transform_indices = @transform_1, window_bounds = array<i64: 32, 96>}, {pipeline_mode = #tpu.pipeline_mode<synchronous>, transform_indices = @transform_2, window_bounds = array<i64: 1, 96>}, {transform_indices = @transform_3, window_bounds = array<i64: 1, 8, 32>}]} {
    %c0 = arith.constant 0 : index
    %c0_0 = arith.constant 0 : index
    %c0_1 = arith.constant 0 : index
    %0 = vector.load %arg1[%c0, %c0_0, %c0_1] : memref<1x8x32xf32, #tpu.memory_space<vmem>>, vector<1x8x32xf32>
    %1 = vector.shape_cast %0 : vector<1x8x32xf32> to vector<8x32xf32>
    %c0_2 = arith.constant 0 : index
    %c0_3 = arith.constant 0 : index
    %2 = vector.load %arg2[%c0_2, %c0_3] : memref<32x96xf32, #tpu.memory_space<vmem>>, vector<32x96xf32>
    %cst = arith.constant dense<0.000000e+00> : vector<8x96xf32>
    %3 = tpu.matmul %1, %2, %cst {dimension_numbers = #tpu.dot_dimension_numbers<[1], [0], [0], [1], [0, 0, 1, 1], [], []>} : vector<8x32xf32>, vector<32x96xf32>, vector<8x96xf32> -> vector<8x96xf32>
    %c0_4 = arith.constant 0 : index
    %c0_5 = arith.constant 0 : index
    %4 = vector.load %arg3[%c0_4, %c0_5] : memref<1x96xf32, #tpu.memory_space<vmem>>, vector<1x96xf32>
    %5 = vector.broadcast %4 : vector<1x96xf32> to vector<8x96xf32>
    %6 = arith.addf %3, %5 : vector<8x96xf32>
    %7 = vector.extract_strided_slice %6 {offsets = [0, 0], sizes = [8, 32], strides = [1, 1]} : vector<8x96xf32> to vector<8x32xf32>
    %8 = vector.extract_strided_slice %6 {offsets = [0, 32], sizes = [8, 32], strides = [1, 1]} : vector<8x96xf32> to vector<8x32xf32>
    %9 = vector.extract_strided_slice %6 {offsets = [0, 64], sizes = [8, 32], strides = [1, 1]} : vector<8x96xf32> to vector<8x32xf32>
    %10 = vector.extract_strided_slice %7 {offsets = [0, 0], sizes = [8, 8], strides = [1, 1]} : vector<8x32xf32> to vector<8x8xf32>
    %11 = vector.extract_strided_slice %8 {offsets = [0, 0], sizes = [8, 8], strides = [1, 1]} : vector<8x32xf32> to vector<8x8xf32>
    %12 = vector.extract_strided_slice %9 {offsets = [0, 0], sizes = [8, 8], strides = [1, 1]} : vector<8x32xf32> to vector<8x8xf32>
    %cst_6 = arith.constant dense<0.000000e+00> : vector<8x8xf32>
    %13 = tpu.matmul %10, %11, %cst_6 {dimension_numbers = #tpu.dot_dimension_numbers<[1], [1], [0], [0], [0, 0, 1, 0], [], []>} : vector<8x8xf32>, vector<8x8xf32>, vector<8x8xf32> -> vector<8x8xf32>
    %cst_7 = arith.constant 0.353553385 : f32
    %14 = vector.broadcast %cst_7 : f32 to vector<8x8xf32>
    %15 = arith.mulf %13, %14 : vector<8x8xf32>
    %cst_8 = arith.constant dense<0xFF800000> : vector<8xf32>
    %16 = vector.multi_reduction <maximumf>, %15, %cst_8 [1] : vector<8x8xf32> to vector<8xf32>
    %17 = vector.shape_cast %16 : vector<8xf32> to vector<8x1xf32>
    %18 = vector.broadcast %17 : vector<8x1xf32> to vector<8x8xf32>
    %19 = arith.subf %15, %18 : vector<8x8xf32>
    %20 = math.exp %19 : vector<8x8xf32>
    %cst_9 = arith.constant dense<0.000000e+00> : vector<8xf32>
    %21 = vector.multi_reduction <add>, %20, %cst_9 [1] : vector<8x8xf32> to vector<8xf32>
    %22 = vector.shape_cast %21 : vector<8xf32> to vector<8x1xf32>
    %23 = tpu.reciprocal %22 {approx = true} : vector<8x1xf32> -> vector<8x1xf32>
    %24 = vector.broadcast %23 : vector<8x1xf32> to vector<8x8xf32>
    %25 = arith.mulf %20, %24 : vector<8x8xf32>
    %cst_10 = arith.constant dense<0.000000e+00> : vector<8x8xf32>
    %26 = tpu.matmul %25, %12, %cst_10 {dimension_numbers = #tpu.dot_dimension_numbers<[1], [0], [0], [1], [0, 0, 1, 1], [], []>} : vector<8x8xf32>, vector<8x8xf32>, vector<8x8xf32> -> vector<8x8xf32>
    %27 = vector.extract_strided_slice %7 {offsets = [0, 8], sizes = [8, 8], strides = [1, 1]} : vector<8x32xf32> to vector<8x8xf32>
    %28 = vector.extract_strided_slice %8 {offsets = [0, 8], sizes = [8, 8], strides = [1, 1]} : vector<8x32xf32> to vector<8x8xf32>
    %29 = vector.extract_strided_slice %9 {offsets = [0, 8], sizes = [8, 8], strides = [1, 1]} : vector<8x32xf32> to vector<8x8xf32>
    %cst_11 = arith.constant dense<0.000000e+00> : vector<8x8xf32>
    %30 = tpu.matmul %27, %28, %cst_11 {dimension_numbers = #tpu.dot_dimension_numbers<[1], [1], [0], [0], [0, 0, 1, 0], [], []>} : vector<8x8xf32>, vector<8x8xf32>, vector<8x8xf32> -> vector<8x8xf32>
    %cst_12 = arith.constant 0.353553385 : f32
    %31 = vector.broadcast %cst_12 : f32 to vector<8x8xf32>
    %32 = arith.mulf %30, %31 : vector<8x8xf32>
    %cst_13 = arith.constant dense<0xFF800000> : vector<8xf32>
    %33 = vector.multi_reduction <maximumf>, %32, %cst_13 [1] : vector<8x8xf32> to vector<8xf32>
    %34 = vector.shape_cast %33 : vector<8xf32> to vector<8x1xf32>
    %35 = vector.broadcast %34 : vector<8x1xf32> to vector<8x8xf32>
    %36 = arith.subf %32, %35 : vector<8x8xf32>
    %37 = math.exp %36 : vector<8x8xf32>
    %cst_14 = arith.constant dense<0.000000e+00> : vector<8xf32>
    %38 = vector.multi_reduction <add>, %37, %cst_14 [1] : vector<8x8xf32> to vector<8xf32>
    %39 = vector.shape_cast %38 : vector<8xf32> to vector<8x1xf32>
    %40 = tpu.reciprocal %39 {approx = true} : vector<8x1xf32> -> vector<8x1xf32>
    %41 = vector.broadcast %40 : vector<8x1xf32> to vector<8x8xf32>
    %42 = arith.mulf %37, %41 : vector<8x8xf32>
    %cst_15 = arith.constant dense<0.000000e+00> : vector<8x8xf32>
    %43 = tpu.matmul %42, %29, %cst_15 {dimension_numbers = #tpu.dot_dimension_numbers<[1], [0], [0], [1], [0, 0, 1, 1], [], []>} : vector<8x8xf32>, vector<8x8xf32>, vector<8x8xf32> -> vector<8x8xf32>
    %44 = vector.extract_strided_slice %7 {offsets = [0, 16], sizes = [8, 8], strides = [1, 1]} : vector<8x32xf32> to vector<8x8xf32>
    %45 = vector.extract_strided_slice %8 {offsets = [0, 16], sizes = [8, 8], strides = [1, 1]} : vector<8x32xf32> to vector<8x8xf32>
    %46 = vector.extract_strided_slice %9 {offsets = [0, 16], sizes = [8, 8], strides = [1, 1]} : vector<8x32xf32> to vector<8x8xf32>
    %cst_16 = arith.constant dense<0.000000e+00> : vector<8x8xf32>
    %47 = tpu.matmul %44, %45, %cst_16 {dimension_numbers = #tpu.dot_dimension_numbers<[1], [1], [0], [0], [0, 0, 1, 0], [], []>} : vector<8x8xf32>, vector<8x8xf32>, vector<8x8xf32> -> vector<8x8xf32>
    %cst_17 = arith.constant 0.353553385 : f32
    %48 = vector.broadcast %cst_17 : f32 to vector<8x8xf32>
    %49 = arith.mulf %47, %48 : vector<8x8xf32>
    %cst_18 = arith.constant dense<0xFF800000> : vector<8xf32>
    %50 = vector.multi_reduction <maximumf>, %49, %cst_18 [1] : vector<8x8xf32> to vector<8xf32>
    %51 = vector.shape_cast %50 : vector<8xf32> to vector<8x1xf32>
    %52 = vector.broadcast %51 : vector<8x1xf32> to vector<8x8xf32>
    %53 = arith.subf %49, %52 : vector<8x8xf32>
    %54 = math.exp %53 : vector<8x8xf32>
    %cst_19 = arith.constant dense<0.000000e+00> : vector<8xf32>
    %55 = vector.multi_reduction <add>, %54, %cst_19 [1] : vector<8x8xf32> to vector<8xf32>
    %56 = vector.shape_cast %55 : vector<8xf32> to vector<8x1xf32>
    %57 = tpu.reciprocal %56 {approx = true} : vector<8x1xf32> -> vector<8x1xf32>
    %58 = vector.broadcast %57 : vector<8x1xf32> to vector<8x8xf32>
    %59 = arith.mulf %54, %58 : vector<8x8xf32>
    %cst_20 = arith.constant dense<0.000000e+00> : vector<8x8xf32>
    %60 = tpu.matmul %59, %46, %cst_20 {dimension_numbers = #tpu.dot_dimension_numbers<[1], [0], [0], [1], [0, 0, 1, 1], [], []>} : vector<8x8xf32>, vector<8x8xf32>, vector<8x8xf32> -> vector<8x8xf32>
    %61 = vector.extract_strided_slice %7 {offsets = [0, 24], sizes = [8, 8], strides = [1, 1]} : vector<8x32xf32> to vector<8x8xf32>
    %62 = vector.extract_strided_slice %8 {offsets = [0, 24], sizes = [8, 8], strides = [1, 1]} : vector<8x32xf32> to vector<8x8xf32>
    %63 = vector.extract_strided_slice %9 {offsets = [0, 24], sizes = [8, 8], strides = [1, 1]} : vector<8x32xf32> to vector<8x8xf32>
    %cst_21 = arith.constant dense<0.000000e+00> : vector<8x8xf32>
    %64 = tpu.matmul %61, %62, %cst_21 {dimension_numbers = #tpu.dot_dimension_numbers<[1], [1], [0], [0], [0, 0, 1, 0], [], []>} : vector<8x8xf32>, vector<8x8xf32>, vector<8x8xf32> -> vector<8x8xf32>
    %cst_22 = arith.constant 0.353553385 : f32
    %65 = vector.broadcast %cst_22 : f32 to vector<8x8xf32>
    %66 = arith.mulf %64, %65 : vector<8x8xf32>
    %cst_23 = arith.constant dense<0xFF800000> : vector<8xf32>
    %67 = vector.multi_reduction <maximumf>, %66, %cst_23 [1] : vector<8x8xf32> to vector<8xf32>
    %68 = vector.shape_cast %67 : vector<8xf32> to vector<8x1xf32>
    %69 = vector.broadcast %68 : vector<8x1xf32> to vector<8x8xf32>
    %70 = arith.subf %66, %69 : vector<8x8xf32>
    %71 = math.exp %70 : vector<8x8xf32>
    %cst_24 = arith.constant dense<0.000000e+00> : vector<8xf32>
    %72 = vector.multi_reduction <add>, %71, %cst_24 [1] : vector<8x8xf32> to vector<8xf32>
    %73 = vector.shape_cast %72 : vector<8xf32> to vector<8x1xf32>
    %74 = tpu.reciprocal %73 {approx = true} : vector<8x1xf32> -> vector<8x1xf32>
    %75 = vector.broadcast %74 : vector<8x1xf32> to vector<8x8xf32>
    %76 = arith.mulf %71, %75 : vector<8x8xf32>
    %cst_25 = arith.constant dense<0.000000e+00> : vector<8x8xf32>
    %77 = tpu.matmul %76, %63, %cst_25 {dimension_numbers = #tpu.dot_dimension_numbers<[1], [0], [0], [1], [0, 0, 1, 1], [], []>} : vector<8x8xf32>, vector<8x8xf32>, vector<8x8xf32> -> vector<8x8xf32>
    %78 = tpu.concatenate %26, %43, %60, %77 in 1 : vector<8x8xf32>, vector<8x8xf32>, vector<8x8xf32>, vector<8x8xf32> -> vector<8x32xf32>
    %c0_26 = arith.constant 0 : index
    %c0_27 = arith.constant 0 : index
    %c0_28 = arith.constant 0 : index
    %79 = vector.load %arg4[%c0_26, %c0_27, %c0_28] : memref<1x8x32xf32, #tpu.memory_space<vmem>>, vector<1x8x32xf32>
    %80 = vector.shape_cast %79 : vector<1x8x32xf32> to vector<8x32xf32>
    %81 = vector.shape_cast %78 : vector<8x32xf32> to vector<1x8x32xf32>
    tpu.vector_store %arg4[%c0_26, %c0_27, %c0_28], %81 {strides = array<i32>} : memref<1x8x32xf32, #tpu.memory_space<vmem>>, vector<1x8x32xf32>,
    return
  }
  func.func @transform_0(%arg0: i32) -> (i32, i32, i32) {
    %c0_i32 = arith.constant 0 : i32
    %c0_i32_0 = arith.constant 0 : i32
    %c0_i32_1 = arith.constant 0 : i32
    return %arg0, %c0_i32, %c0_i32_0 : i32, i32, i32
  }
  func.func @transform_1(%arg0: i32) -> (i32, i32) {
    %c0_i32 = arith.constant 0 : i32
    %c0_i32_0 = arith.constant 0 : i32
    %c0_i32_1 = arith.constant 0 : i32
    return %c0_i32, %c0_i32_0 : i32, i32
  }
  func.func @transform_2(%arg0: i32) -> (i32, i32) {
    %c0_i32 = arith.constant 0 : i32
    %c0_i32_0 = arith.constant 0 : i32
    %c0_i32_1 = arith.constant 0 : i32
    return %c0_i32, %c0_i32_0 : i32, i32
  }
  func.func @transform_3(%arg0: i32) -> (i32, i32, i32) {
    %c0_i32 = arith.constant 0 : i32
    %c0_i32_0 = arith.constant 0 : i32
    %c0_i32_1 = arith.constant 0 : i32
    return %arg0, %c0_i32, %c0_i32_0 : i32, i32, i32
  }
}

</mosaic_0001>

<llo_original>
// kernel: tpu_custom_call.1
$region0: #{tpu_custom_call.1}
  #allocation0 [shape = 'u32[]', space=smem, size = 0x4, offset = 0x4, fixed_abs, tag = 'smem constant byte address 0x4 - core index']
  #allocation1 [shape = 'u32[72,128]{1,0:T(1,128)}', space=vmem, size = 0x9000, scoped, tag = 'internal scratch']
  %s0 = inlined_call_operand.hbm [shape: f32[2,8,32], index: 0, kind: input, shape index: {}]
  %s1 = inlined_call_operand.hbm [shape: f32[32,96], index: 1, kind: input, shape index: {}]
  %s2 = inlined_call_operand.vmem [shape: f32[1,96], index: 2, kind: input, shape index: {}]
  %s3 = inlined_call_operand.hbm [shape: f32[2,8,32], index: 3, kind: output, shape index: {}]
  %s4 = sld [smem:[#allocation0]]
  $region53: #{tpu_custom_call.1} parent=0
    _
  %s6 = ssub.s32 1, %s4
  %s7 = scalar_select 0, %s6, %s4
  $region1: #{tpu_custom_call.1} parent=0
    #allocation2 [shape = 'u8[8192]{0}', space=vmem, size = 0x2000, scoped, tag = 'input window, operand 0']
    #allocation3 [shape = 's32[2]{0}', space=sflag, size = 0x8, scoped, tag = 'scoped memory for tpu_custom_call.1']
    #allocation4 [shape = 's32[2]{0}', space=sflag, size = 0x8, scoped, tag = 'scoped memory for tpu_custom_call.1']
    #allocation5 [shape = 'u8[16384]{0}', space=vmem, size = 0x4000, scoped, tag = 'input window, operand 1, single buffered']
    #allocation6 [shape = 's32[1]{0}', space=sflag, size = 0x4, scoped, tag = 'scoped memory for tpu_custom_call.1']
    #allocation7 [shape = 'u8[8192]{0}', space=vmem, size = 0x2000, scoped, tag = 'output window, operand 0']
    %8 = vsyncpa [#allocation3], 0
    %s9 = scalar_lea.sflag [#allocation3], 1
    %10 = vsyncpa %s9, 0
    %11 = vsyncpa [#allocation6], 0
    %12 = vsyncpa [#allocation4], 0
    %s13 = scalar_lea.sflag [#allocation4], 1
    %14 = vsyncpa %s13, 0
    loop: start=0, step=1, limit=4
    $region2: #{tpu_custom_call.1} parent=1 // loop_pre_header
      _
    $region3: #{tpu_custom_call.1} parent=1 // loop_header
      %s16 = sphi 0, %s20
      %p17 = scmp.ge.s32.totalorder %s16, 4
      %s26 = sphi 0, %s28
      %s29 = sphi 0, %s26
      %s30 = sphi 0, %s29
      %s46 = sphi 0, %s30
      %s50 = sphi 0, %s50
      %s52 = sphi 0, %s50
      %s53 = sphi 0, %s52
      %s67 = sphi 0, %s53
      %s71 = sphi 0, %s71
      %s73 = sphi 0, %s71
      %s74 = sphi 0, %s73
      %s88 = sphi 0, %s74
      %s94 = sphi 0, %s96
      %s97 = sphi 0, %s94
      %s98 = sphi 0, %s97
      %s114 = sphi 0, %s98
    $region4: #{tpu_custom_call.1} parent=1 // loop_header_branch
      %19 = sbr.rel (%p17) target = $region8
    $region5: #{tpu_custom_call.1} parent=1 // loop_body
      %s21 = ssub.s32 %s16, 1
      %s22 = ssub.s32 %s16, 2
      %s23 = sadd.s32 %s16, 1
      %s24 = ssub.s32 %s16, %s23
      %p25 = scmp.eq.s32.totalorder %s24, 0
      %s27 = sadd.s32 %s26, 1
      %s28 = scalar_select %p25, %s26, %s27
      %p31 = pneg %p25
      %p32 = scmp.eq.s32.totalorder %s16, 1
      %p33 = por %p31, %p32
      %p34 = scmp.ne.s32.totalorder %s26, %s29
      %p35 = scmp.eq.s32.totalorder %s16, 0
      %p36 = por %p34, %p35
      %p37 = scmp.ne.s32.totalorder %s26, %s29
      %p38 = scmp.eq.s32.totalorder %s21, 1
      %p39 = por %p37, %p38
      %p40 = scmp.ne.s32.totalorder %s29, %s30
      %p41 = scmp.eq.s32.totalorder %s21, 0
      %p42 = por %p40, %p41
      %p43 = scmp.ne.s32.totalorder %s29, %s30
      %p44 = scmp.eq.s32.totalorder %s22, 1
      %p45 = por %p43, %p44
      %p47 = scmp.ne.s32.totalorder %s30, %s46
      %p48 = scmp.eq.s32.totalorder %s22, 0
      %p49 = por %p47, %p48
      %s51 = sadd.s32 %s50, 1
      %p54 = scmp.eq.s32.totalorder %s16, 1
      %p55 = scmp.ne.s32.totalorder %s50, %s52
      %p56 = scmp.eq.s32.totalorder %s16, 0
      %p57 = por %p55, %p56
      %p58 = scmp.ne.s32.totalorder %s50, %s52
      %p59 = scmp.eq.s32.totalorder %s21, 1
      %p60 = por %p58, %p59
      %p61 = scmp.ne.s32.totalorder %s52, %s53
      %p62 = scmp.eq.s32.totalorder %s21, 0
      %p63 = por %p61, %p62
      %p64 = scmp.ne.s32.totalorder %s52, %s53
      %p65 = scmp.eq.s32.totalorder %s22, 1
      %p66 = por %p64, %p65
      %p68 = scmp.ne.s32.totalorder %s53, %s67
      %p69 = scmp.eq.s32.totalorder %s22, 0
      %p70 = por %p68, %p69
      %s72 = sadd.s32 %s71, 1
      %p75 = scmp.eq.s32.totalorder %s16, 1
      %p76 = scmp.ne.s32.totalorder %s71, %s73
      %p77 = scmp.eq.s32.totalorder %s16, 0
      %p78 = por %p76, %p77
      %p79 = scmp.ne.s32.totalorder %s71, %s73
      %p80 = scmp.eq.s32.totalorder %s21, 1
      %p81 = por %p79, %p80
      %p82 = scmp.ne.s32.totalorder %s73, %s74
      %p83 = scmp.eq.s32.totalorder %s21, 0
      %p84 = por %p82, %p83
      %p85 = scmp.ne.s32.totalorder %s73, %s74
      %p86 = scmp.eq.s32.totalorder %s22, 1
      %p87 = por %p85, %p86
      %p89 = scmp.ne.s32.totalorder %s74, %s88
      %p90 = scmp.eq.s32.totalorder %s22, 0
      %p91 = por %p89, %p90
      %s92 = ssub.s32 %s16, %s23
      %p93 = scmp.eq.s32.totalorder %s92, 0
      %s95 = sadd.s32 %s94, 1
      %s96 = scalar_select %p93, %s94, %s95
      %p99 = pneg %p93
      %p100 = scmp.eq.s32.totalorder %s16, 1
      %p101 = por %p99, %p100
      %p102 = scmp.ne.s32.totalorder %s94, %s97
      %p103 = scmp.eq.s32.totalorder %s16, 0
      %p104 = por %p102, %p103
      %p105 = scmp.ne.s32.totalorder %s94, %s97
      %p106 = scmp.eq.s32.totalorder %s21, 1
      %p107 = por %p105, %p106
      %p108 = scmp.ne.s32.totalorder %s97, %s98
      %p109 = scmp.eq.s32.totalorder %s21, 0
      %p110 = por %p108, %p109
      %p111 = scmp.ne.s32.totalorder %s97, %s98
      %p112 = scmp.eq.s32.totalorder %s22, 1
      %p113 = por %p111, %p112
      %p115 = scmp.ne.s32.totalorder %s98, %s114
      %p116 = scmp.eq.s32.totalorder %s22, 0
      %p117 = por %p115, %p116
      %p118 = scmp.le.s32.totalorder 1, %s16
      %p119 = scmp.lt.s32.totalorder %s16, 3
      %p120 = pnand %p118, %p119
      %p121 = pneg %p120
      // Predicated region
      $region9: #{tpu_custom_call.1} parent=5 // pred_check
        _
      $region10: #{tpu_custom_call.1} parent=5 // pred_check_branch
        %123 = sbr.rel (%p120) target = $region12
      $region11: #{tpu_custom_call.1} parent=5 // pred_region
        %s124 = ssub.s32 %s16, 1
        // Predicated region
        $region13: #{tpu_custom_call.1} parent=11 // pred_check
          %p125 = pneg %p63
        $region14: #{tpu_custom_call.1} parent=11 // pred_check_branch
          %127 = sbr.rel (%p125) target = $region16
        $region15: #{tpu_custom_call.1} parent=11 // pred_region
          %129 = vsyncadd [#allocation6], 0
          %s130 = sshll.u32 %s1, 4
          %s131 = int_to_ptr.hbm [resolvable:$true] %s130
          %s132 = sshll.u32 [#allocation5], 4
          %s133 = int_to_ptr.vmem [resolvable:$true] %s132
          %138 = dma.hbm_to_vmem [thread:$0]  %s131, 512, %s133, [#allocation6], 128, 128, 8
        $region16: #{tpu_custom_call.1} parent=11 // pred_fallthru
          _
        // Predicated region
        $region17: #{tpu_custom_call.1} parent=11 // pred_check
          %p139 = pneg %p84
        $region18: #{tpu_custom_call.1} parent=11 // pred_check_branch
          %141 = sbr.rel (%p139) target = $region20
        $region19: #{tpu_custom_call.1} parent=11 // pred_region
          _
        $region20: #{tpu_custom_call.1} parent=11 // pred_fallthru
          _
      $region12: #{tpu_custom_call.1} parent=5 // pred_fallthru
        _
      %p142 = scmp.lt.s32.totalorder %s16, 2
      // Predicated region
      $region21: #{tpu_custom_call.1} parent=5 // pred_check
        %p143 = pneg %p142
      $region22: #{tpu_custom_call.1} parent=5 // pred_check_branch
        %145 = sbr.rel (%p143) target = $region24
      $region23: #{tpu_custom_call.1} parent=5 // pred_region
        // Predicated region
        $region25: #{tpu_custom_call.1} parent=23 // pred_check
          %p146 = pneg %p36
        $region26: #{tpu_custom_call.1} parent=23 // pred_check_branch
          %148 = sbr.rel (%p146) target = $region28
        $region27: #{tpu_custom_call.1} parent=23 // pred_region
          %s149 = sand.u32 %s26, 1
          %s150 = scalar_lea.sflag [#allocation3], %s149
          %s151 = sand.u32 %s26, 1
          %s152 = smul.addr %s151, 8
          %s153 = scalar_lea.vmem [#allocation2], %s152
          %155 = vsyncadd %s150, 0
          %s156 = smul.addr %s16, 8
          %s157 = scalar_lea.hbm %s0, %s156
          %s159 = sshll.u32 %s157, 4
          %s160 = int_to_ptr.hbm [resolvable:$true] %s159
          %s161 = sshll.u32 %s153, 4
          %s162 = int_to_ptr.vmem [resolvable:$true] %s161
          %164 = dma.hbm_to_vmem [thread:$0]  %s160, 128, %s162, %s150
        $region28: #{tpu_custom_call.1} parent=23 // pred_fallthru
          _
      $region24: #{tpu_custom_call.1} parent=5 // pred_fallthru
        _
      %p165 = scmp.le.s32.totalorder 1, %s16
      %p166 = scmp.lt.s32.totalorder %s16, 3
      %p167 = pnand %p165, %p166
      %p168 = pneg %p167
      // Predicated region
      $region29: #{tpu_custom_call.1} parent=5 // pred_check
        _
      $region30: #{tpu_custom_call.1} parent=5 // pred_check_branch
        %170 = sbr.rel (%p167) target = $region32
      $region31: #{tpu_custom_call.1} parent=5 // pred_region
        %s171 = ssub.s32 %s16, 1
        %s172 = sand.u32 %s29, 1
        %s173 = scalar_lea.sflag [#allocation3], %s172
        %s174 = sand.u32 %s29, 1
        %s175 = smul.addr %s174, 8
        %s176 = scalar_lea.vmem [#allocation2], %s175
        // Predicated region
        $region33: #{tpu_custom_call.1} parent=31 // pred_check
          %p177 = pneg %p42
        $region34: #{tpu_custom_call.1} parent=31 // pred_check_branch
          %179 = sbr.rel (%p177) target = $region36
        $region35: #{tpu_custom_call.1} parent=31 // pred_region
          %181 = dma.done %s173, 128
        $region36: #{tpu_custom_call.1} parent=31 // pred_fallthru
          _
        // Predicated region
        $region37: #{tpu_custom_call.1} parent=31 // pred_check
          %p182 = pneg %p63
        $region38: #{tpu_custom_call.1} parent=31 // pred_check_branch
          %184 = sbr.rel (%p182) target = $region40
        $region39: #{tpu_custom_call.1} parent=31 // pred_region
          %186 = dma.done [#allocation6], 512
        $region40: #{tpu_custom_call.1} parent=31 // pred_fallthru
          _
        %s187 = sand.u32 %s29, 1
        %s188 = scalar_lea.sflag [#allocation3], %s187
        %s189 = sand.u32 %s29, 1
        %s190 = smul.addr %s189, 8
        %s191 = scalar_lea.vmem [#allocation2], %s190
        %p192 = pneg %p42
        %p193 = pneg %p39
        %p194 = pneg %p63
        %p195 = pneg %p60
        %p196 = pneg %p84
        %p197 = pneg %p81
        %p198 = pneg %p110
        %p199 = pneg %p107
        %s200 = sand.u32 %s97, 1
        %s201 = scalar_lea.sflag [#allocation4], %s200
        %s202 = sand.u32 %s97, 1
        %s203 = smul.addr %s202, 8
        %s204 = scalar_lea.vmem [#allocation7], %s203
        %v205 = vld [vmem:[%s176] sm:$0xff]
        %v206 = vld [vmem:[#allocation5] sm:$0xff]
        %v207 = vld [vmem:[#allocation5 + $0x8] sm:$0xff]
        %v208 = vld [vmem:[#allocation5 + $0x10] sm:$0xff]
        %v209 = vld [vmem:[#allocation5 + $0x18] sm:$0xff]
        %v210 = vld [vmem:[%s2] sm:$0x1]
        %v212 = vperm.slane %v210, 0
        %vm214 = vcmask 261120
        %v216 = vsel %vm214, %v205, 0
        %218 = vmatpush.msra.mxu0 0.0
        %219 = vmatpush.msra.mxu0 0.0
        %220 = vmatpush.msra.mxu0 0.0
        %221 = vmatpush.msra.mxu0 0.0
        %222 = vmatpush.msra.mxu0 0.0
        %223 = vmatpush.msra.mxu0 0.0
        %224 = vmatpush.msra.mxu0 0.0
        %225 = vmatpush.msra.mxu0 0.0
        %226 = vmatpush.msra.mxu0 0.0
        %227 = vmatpush.msra.mxu0 0.0
        %228 = vmatpush.msra.mxu0 0.0
        %229 = vmatpush.msra.mxu0 0.0
        %230 = vmatpush.msra.mxu0 %v209
        %231 = vmatpush.msra.mxu0 %v208
        %232 = vmatpush.msra.mxu0 %v207
        %233 = vmatpush.msra.mxu0 %v206
        %234 = vmatmul.f32.gmra.mxu0 %v216
        %v235 = vpop.f32.mrf.mxu0
        %v236 = vadd.f32 %v212, %v235
        %237 = vdwg.mxu0
        %239 = vrot.lane.b32.xlu0 %v236, 96
        %v240 = vpop.permute.xlu0 %239
        %vm241 = vcmask 64512
        %v242 = vsel %vm241, %v236, 0
        %v244 = vsel %vm241, %v240, 0
        %246 = vmatpush.xpose.msra.mxu0 0.0
        %247 = vmatpush.xpose.msra.mxu0 0.0
        %248 = vmatpush.xpose.msra.mxu0 0.0
        %249 = vmatpush.xpose.msra.mxu0 0.0
        %250 = vmatpush.xpose.msra.mxu0 0.0
        %251 = vmatpush.xpose.msra.mxu0 0.0
        %252 = vmatpush.xpose.msra.mxu0 0.0
        %253 = vmatpush.xpose.msra.mxu0 0.0
        %254 = vmatpush.xpose.msra.mxu0 0.0
        %255 = vmatpush.xpose.msra.mxu0 0.0
        %256 = vmatpush.xpose.msra.mxu0 0.0
        %257 = vmatpush.xpose.msra.mxu0 0.0
        %258 = vmatpush.xpose.msra.mxu0 0.0
        %259 = vmatpush.xpose.msra.mxu0 0.0
        %260 = vmatpush.xpose.msra.mxu0 0.0
        %261 = vmatpush.xpose.msra.mxu0 %v244
        %262 = vmatmul.f32.gmra.mxu0 %v242
        %v263 = vpop.f32.mrf.mxu0
        %v264 = vadd.f32 0.0, %v263
        %265 = vdwg.mxu0
        %v266 = vmul.f32 %v264, 0.35355338
        %v267 = vsel %vm241, %v266, -inf
        %268 = vmax.xlane.f32.xlu0 %v267
        %v269 = vpop.xlane.xlu0 %268
        %v270 = vsub.f32 %v266, %v269
        %v271 = vmul.f32 %v270, 1.442695
        %v272 = vpow.pop %v271
        %v273 = vsel %vm241, %v272, 0.0
        %274 = vadd.xlane.f32.xlu0 %v273
        %v275 = vpop.xlane.xlu0 %274
        %v276 = vrcp.pop %v275
        %v277 = vmul.f32 %v272, %v276
        %278 = vrot.lane.b32.xlu0 %v236, 64
        %v279 = vpop.permute.xlu0 %278
        %v282 = vsel %vm241, %v277, 0
        %284 = vmatpush.msra.mxu0 0.0
        %285 = vmatpush.msra.mxu0 0.0
        %286 = vmatpush.msra.mxu0 0.0
        %287 = vmatpush.msra.mxu0 0.0
        %288 = vmatpush.msra.mxu0 0.0
        %289 = vmatpush.msra.mxu0 0.0
        %290 = vmatpush.msra.mxu0 0.0
        %291 = vmatpush.msra.mxu0 0.0
        %292 = vmatpush.msra.mxu0 0.0
        %293 = vmatpush.msra.mxu0 0.0
        %294 = vmatpush.msra.mxu0 0.0
        %295 = vmatpush.msra.mxu0 0.0
        %296 = vmatpush.msra.mxu0 0.0
        %297 = vmatpush.msra.mxu0 0.0
        %298 = vmatpush.msra.mxu0 0.0
        %299 = vmatpush.msra.mxu0 %v279
        %300 = vmatmul.f32.gmra.mxu0 %v282
        %v301 = vpop.f32.mrf.mxu0
        %v302 = vadd.f32 0.0, %v301
        %303 = vdwg.mxu0
        %304 = vrot.lane.b32.xlu0 %v236, 120
        %v305 = vpop.permute.xlu0 %304
        %306 = vrot.lane.b32.xlu0 %v236, 88
        %v307 = vpop.permute.xlu0 %306
        %v308 = vsel %vm241, %v305, 0
        %v310 = vsel %vm241, %v307, 0
        %312 = vmatpush.xpose.msra.mxu0 0.0
        %313 = vmatpush.xpose.msra.mxu0 0.0
        %314 = vmatpush.xpose.msra.mxu0 0.0
        %315 = vmatpush.xpose.msra.mxu0 0.0
        %316 = vmatpush.xpose.msra.mxu0 0.0
        %317 = vmatpush.xpose.msra.mxu0 0.0
        %318 = vmatpush.xpose.msra.mxu0 0.0
        %319 = vmatpush.xpose.msra.mxu0 0.0
        %320 = vmatpush.xpose.msra.mxu0 0.0
        %321 = vmatpush.xpose.msra.mxu0 0.0
        %322 = vmatpush.xpose.msra.mxu0 0.0
        %323 = vmatpush.xpose.msra.mxu0 0.0
        %324 = vmatpush.xpose.msra.mxu0 0.0
        %325 = vmatpush.xpose.msra.mxu0 0.0
        %326 = vmatpush.xpose.msra.mxu0 0.0
        %327 = vmatpush.xpose.msra.mxu0 %v310
        %328 = vmatmul.f32.gmra.mxu0 %v308
        %v329 = vpop.f32.mrf.mxu0
        %v330 = vadd.f32 0.0, %v329
        %331 = vdwg.mxu0
        %v332 = vmul.f32 %v330, 0.35355338
        %v333 = vsel %vm241, %v332, -inf
        %334 = vmax.xlane.f32.xlu0 %v333
        %v335 = vpop.xlane.xlu0 %334
        %v336 = vsub.f32 %v332, %v335
        %v337 = vmul.f32 %v336, 1.442695
        %v338 = vpow.pop %v337
        %v339 = vsel %vm241, %v338, 0.0
        %340 = vadd.xlane.f32.xlu0 %v339
        %v341 = vpop.xlane.xlu0 %340
        %v342 = vrcp.pop %v341
        %v343 = vmul.f32 %v338, %v342
        %344 = vrot.lane.b32.xlu0 %v236, 56
        %v345 = vpop.permute.xlu0 %344
        %v348 = vsel %vm241, %v343, 0
        %350 = vmatpush.msra.mxu0 0.0
        %351 = vmatpush.msra.mxu0 0.0
        %352 = vmatpush.msra.mxu0 0.0
        %353 = vmatpush.msra.mxu0 0.0
        %354 = vmatpush.msra.mxu0 0.0
        %355 = vmatpush.msra.mxu0 0.0
        %356 = vmatpush.msra.mxu0 0.0
        %357 = vmatpush.msra.mxu0 0.0
        %358 = vmatpush.msra.mxu0 0.0
        %359 = vmatpush.msra.mxu0 0.0
        %360 = vmatpush.msra.mxu0 0.0
        %361 = vmatpush.msra.mxu0 0.0
        %362 = vmatpush.msra.mxu0 0.0
        %363 = vmatpush.msra.mxu0 0.0
        %364 = vmatpush.msra.mxu0 0.0
        %365 = vmatpush.msra.mxu0 %v345
        %366 = vmatmul.f32.gmra.mxu0 %v348
        %v367 = vpop.f32.mrf.mxu0
        %v368 = vadd.f32 0.0, %v367
        %369 = vdwg.mxu0
        %370 = vrot.lane.b32.xlu0 %v236, 112
        %v371 = vpop.permute.xlu0 %370
        %372 = vrot.lane.b32.xlu0 %v236, 80
        %v373 = vpop.permute.xlu0 %372
        %v374 = vsel %vm241, %v371, 0
        %v376 = vsel %vm241, %v373, 0
        %378 = vmatpush.xpose.msra.mxu0 0.0
        %379 = vmatpush.xpose.msra.mxu0 0.0
        %380 = vmatpush.xpose.msra.mxu0 0.0
        %381 = vmatpush.xpose.msra.mxu0 0.0
        %382 = vmatpush.xpose.msra.mxu0 0.0
        %383 = vmatpush.xpose.msra.mxu0 0.0
        %384 = vmatpush.xpose.msra.mxu0 0.0
        %385 = vmatpush.xpose.msra.mxu0 0.0
        %386 = vmatpush.xpose.msra.mxu0 0.0
        %387 = vmatpush.xpose.msra.mxu0 0.0
        %388 = vmatpush.xpose.msra.mxu0 0.0
        %389 = vmatpush.xpose.msra.mxu0 0.0
        %390 = vmatpush.xpose.msra.mxu0 0.0
        %391 = vmatpush.xpose.msra.mxu0 0.0
        %392 = vmatpush.xpose.msra.mxu0 0.0
        %393 = vmatpush.xpose.msra.mxu0 %v376
        %394 = vmatmul.f32.gmra.mxu0 %v374
        %v395 = vpop.f32.mrf.mxu0
        %v396 = vadd.f32 0.0, %v395
        %397 = vdwg.mxu0
        %v398 = vmul.f32 %v396, 0.35355338
        %v399 = vsel %vm241, %v398, -inf
        %400 = vmax.xlane.f32.xlu0 %v399
        %v401 = vpop.xlane.xlu0 %400
        %v402 = vsub.f32 %v398, %v401
        %v403 = vmul.f32 %v402, 1.442695
        %v404 = vpow.pop %v403
        %v405 = vsel %vm241, %v404, 0.0
        %406 = vadd.xlane.f32.xlu0 %v405
        %v407 = vpop.xlane.xlu0 %406
        %v408 = vrcp.pop %v407
        %v409 = vmul.f32 %v404, %v408
        %410 = vrot.lane.b32.xlu0 %v236, 48
        %v411 = vpop.permute.xlu0 %410
        %v414 = vsel %vm241, %v409, 0
        %416 = vmatpush.msra.mxu0 0.0
        %417 = vmatpush.msra.mxu0 0.0
        %418 = vmatpush.msra.mxu0 0.0
        %419 = vmatpush.msra.mxu0 0.0
        %420 = vmatpush.msra.mxu0 0.0
        %421 = vmatpush.msra.mxu0 0.0
        %422 = vmatpush.msra.mxu0 0.0
        %423 = vmatpush.msra.mxu0 0.0
        %424 = vmatpush.msra.mxu0 0.0
        %425 = vmatpush.msra.mxu0 0.0
        %426 = vmatpush.msra.mxu0 0.0
        %427 = vmatpush.msra.mxu0 0.0
        %428 = vmatpush.msra.mxu0 0.0
        %429 = vmatpush.msra.mxu0 0.0
        %430 = vmatpush.msra.mxu0 0.0
        %431 = vmatpush.msra.mxu0 %v411
        %432 = vmatmul.f32.gmra.mxu0 %v414
        %v433 = vpop.f32.mrf.mxu0
        %v434 = vadd.f32 0.0, %v433
        %435 = vdwg.mxu0
        %436 = vrot.lane.b32.xlu0 %v236, 104
        %v437 = vpop.permute.xlu0 %436
        %438 = vrot.lane.b32.xlu0 %v236, 72
        %v439 = vpop.permute.xlu0 %438
        %v440 = vsel %vm241, %v437, 0
        %v442 = vsel %vm241, %v439, 0
        %444 = vmatpush.xpose.msra.mxu0 0.0
        %445 = vmatpush.xpose.msra.mxu0 0.0
        %446 = vmatpush.xpose.msra.mxu0 0.0
        %447 = vmatpush.xpose.msra.mxu0 0.0
        %448 = vmatpush.xpose.msra.mxu0 0.0
        %449 = vmatpush.xpose.msra.mxu0 0.0
        %450 = vmatpush.xpose.msra.mxu0 0.0
        %451 = vmatpush.xpose.msra.mxu0 0.0
        %452 = vmatpush.xpose.msra.mxu0 0.0
        %453 = vmatpush.xpose.msra.mxu0 0.0
        %454 = vmatpush.xpose.msra.mxu0 0.0
        %455 = vmatpush.xpose.msra.mxu0 0.0
        %456 = vmatpush.xpose.msra.mxu0 0.0
        %457 = vmatpush.xpose.msra.mxu0 0.0
        %458 = vmatpush.xpose.msra.mxu0 0.0
        %459 = vmatpush.xpose.msra.mxu0 %v442
        %460 = vmatmul.f32.gmra.mxu0 %v440
        %v461 = vpop.f32.mrf.mxu0
        %v462 = vadd.f32 0.0, %v461
        %463 = vdwg.mxu0
        %v464 = vmul.f32 %v462, 0.35355338
        %v465 = vsel %vm241, %v464, -inf
        %466 = vmax.xlane.f32.xlu0 %v465
        %v467 = vpop.xlane.xlu0 %466
        %v468 = vsub.f32 %v464, %v467
        %v469 = vmul.f32 %v468, 1.442695
        %v470 = vpow.pop %v469
        %v471 = vsel %vm241, %v470, 0.0
        %472 = vadd.xlane.f32.xlu0 %v471
        %v473 = vpop.xlane.xlu0 %472
        %v474 = vrcp.pop %v473
        %v475 = vmul.f32 %v470, %v474
        %476 = vrot.lane.b32.xlu0 %v236, 40
        %v477 = vpop.permute.xlu0 %476
        %v480 = vsel %vm241, %v475, 0
        %482 = vmatpush.msra.mxu0 0.0
        %483 = vmatpush.msra.mxu0 0.0
        %484 = vmatpush.msra.mxu0 0.0
        %485 = vmatpush.msra.mxu0 0.0
        %486 = vmatpush.msra.mxu0 0.0
        %487 = vmatpush.msra.mxu0 0.0
        %488 = vmatpush.msra.mxu0 0.0
        %489 = vmatpush.msra.mxu0 0.0
        %490 = vmatpush.msra.mxu0 0.0
        %491 = vmatpush.msra.mxu0 0.0
        %492 = vmatpush.msra.mxu0 0.0
        %493 = vmatpush.msra.mxu0 0.0
        %494 = vmatpush.msra.mxu0 0.0
        %495 = vmatpush.msra.mxu0 0.0
        %496 = vmatpush.msra.mxu0 0.0
        %497 = vmatpush.msra.mxu0 %v477
        %498 = vmatmul.f32.gmra.mxu0 %v480
        %v499 = vpop.f32.mrf.mxu0
        %v500 = vadd.f32 0.0, %v499
        %501 = vdwg.mxu0
        %503 = vrot.lane.b32.xlu0 %v368, 8
        %v504 = vpop.permute.xlu0 %503
        %507 = vrot.lane.b32.xlu0 %v434, 16
        %v508 = vpop.permute.xlu0 %507
        %511 = vrot.lane.b32.xlu0 %v500, 24
        %v512 = vpop.permute.xlu0 %511
        %v514 = vsel %vm241, %v302, %v504
        %vm515 = vcmask 130048
        %v516 = vsel %vm515, %v514, %v508
        %vm517 = vcmask 195584
        %v518 = vsel %vm517, %v516, %v512
        %519 = vst.msk [vmem:[%s204] sm:$0xff] %vm214, %v518
        %s520 = sand.u32 %s97, 1
        %s521 = scalar_lea.sflag [#allocation4], %s520
        %s522 = sand.u32 %s97, 1
        %s523 = smul.addr %s522, 8
        %s524 = scalar_lea.vmem [#allocation7], %s523
        // Predicated region
        $region41: #{tpu_custom_call.1} parent=31 // pred_check
          %p525 = pneg %p107
        $region42: #{tpu_custom_call.1} parent=31 // pred_check_branch
          %527 = sbr.rel (%p525) target = $region44
        $region43: #{tpu_custom_call.1} parent=31 // pred_region
          %529 = vsyncadd %s521, 0
          %s530 = smul.addr %s21, 8
          %s531 = scalar_lea.hbm %s3, %s530
          %s533 = sshll.u32 %s524, 4
          %s534 = int_to_ptr.vmem [resolvable:$true] %s533
          %s535 = sshll.u32 %s531, 4
          %s536 = int_to_ptr.hbm [resolvable:$true] %s535
          %538 = dma.vmem_to_hbm [thread:$0]  %s534, 128, %s536, %s521
        $region44: #{tpu_custom_call.1} parent=31 // pred_fallthru
          _
      $region32: #{tpu_custom_call.1} parent=5 // pred_fallthru
        _
      %p539 = scmp.le.s32.totalorder 2, %s16
      // Predicated region
      $region45: #{tpu_custom_call.1} parent=5 // pred_check
        %p540 = pneg %p539
      $region46: #{tpu_custom_call.1} parent=5 // pred_check_branch
        %542 = sbr.rel (%p540) target = $region48
      $region47: #{tpu_custom_call.1} parent=5 // pred_region
        %s543 = ssub.s32 %s16, 2
        // Predicated region
        $region49: #{tpu_custom_call.1} parent=47 // pred_check
          %p544 = pneg %p113
        $region50: #{tpu_custom_call.1} parent=47 // pred_check_branch
          %546 = sbr.rel (%p544) target = $region52
        $region51: #{tpu_custom_call.1} parent=47 // pred_region
          %s547 = sand.u32 %s98, 1
          %s548 = scalar_lea.sflag [#allocation4], %s547
          %s549 = sand.u32 %s98, 1
          %s550 = smul.addr %s549, 8
          %s551 = scalar_lea.vmem [#allocation7], %s550
          %553 = dma.done %s548, 128
        $region52: #{tpu_custom_call.1} parent=47 // pred_fallthru
          _
      $region48: #{tpu_custom_call.1} parent=5 // pred_fallthru
        _
    $region6: #{tpu_custom_call.1} parent=1 // loop_footer
      %s20 = sadd.s32 1, %s16
    $region7: #{tpu_custom_call.1} parent=1 // loop_footer_branch
      %15 = sbr.rel target = $region3
    $region8: #{tpu_custom_call.1} parent=1 // loop_exit
      _
    %554 = vsyncpa [#allocation3], 1
    %s555 = scalar_lea.sflag [#allocation3], 1
    %556 = vsyncpa %s555, 1
    %557 = vsyncpa [#allocation6], 1
    %558 = vsyncpa [#allocation4], 1
    %s559 = scalar_lea.sflag [#allocation4], 1
    %560 = vsyncpa %s559, 1

</llo_original>
